<compile_context>
chip_gen: v7x
topology: tpu7x:2x2x1
jax: 0.10.0
libtpu: 0.0.40
codegen_flags: <defaults>
</compile_context>

<pallas_src>
import functools

import jax
import jax.numpy as jnp
from jax.experimental import pallas as pl
from jax.experimental.pallas import tpu as pltpu

GAUSS_TAPS = jnp.array([0.05, 0.25, 0.4, 0.25, 0.05], dtype=jnp.float32)


def _conv_matrix(n: int, taps: jnp.ndarray) -> jnp.ndarray:
    """1-D replicate-padded 5-tap conv as an (n, n) matrix: out = M @ vec."""
    offs = jnp.arange(-2, 3)
    idx = jnp.clip(jnp.arange(n)[:, None] + offs[None, :], 0, n - 1)  # (n, 5)
    mat = jnp.zeros((n, n), jnp.float32)
    mat = mat.at[jnp.arange(n)[:, None], idx].add(taps[None, :])
    return mat


def _tpu_hw_params():
    """Best-effort (physical VMEM bytes per TensorCore, TensorCores per chip)."""
    vmem_phys = 64 * 1024 * 1024          # conservative default = v7x per-TC
    n_cores = 1
    try:
        info = pltpu.get_tpu_info()
        vmem_phys = int(getattr(info, "vmem_capacity_bytes", vmem_phys))
    except Exception:
        pass
    kind = ""
    try:
        kind = jax.devices()[0].device_kind.lower()
    except Exception:
        pass
    if "v7" in kind:                      # 2 TCs/chip, 64 MiB VMEM per TC
        n_cores = 2
        vmem_phys = min(vmem_phys, 64 * 1024 * 1024)
    return vmem_phys, n_cores


def _edge_loss_kernel(inv_total, sub_h, n_sub,
                      a2_ref, b2_ref, d_ref, o_ref, acc_ref):
    s = pl.program_id(1)

    @pl.when(s == 0)
    def _():
        acc_ref[...] = jnp.zeros_like(acc_ref)

    A2 = a2_ref[...]          # (BH, BH) block-diag folded row conv·mask·conv
    B2 = b2_ref[...]          # (BW, BW) block-diag folded col conv·mask·conv

    def body(k, carry):
        r0 = pl.multiple_of(k * sub_h, sub_h)
        d = d_ref[pl.ds(r0, sub_h), :]          # packed (BH, BW) diff sub-slab
        # laplacian(d) = d - blur(4*evenmask*blur(d)) = d - A2 @ d @ B2
        # (laplacian is linear, so d = x - y was formed once in the wrapper).
        t = jnp.dot(A2, d, preferred_element_type=jnp.float32)
        lap = d - jnp.dot(t, B2, preferred_element_type=jnp.float32)
        acc_ref[...] = acc_ref[...] + lap * lap
        return carry

    jax.lax.fori_loop(0, n_sub, body, 0, unroll=True)

    @pl.when(s == pl.num_programs(1) - 1)
    def _():
        o_ref[...] = jnp.zeros_like(o_ref) + jnp.sum(acc_ref[...]) * inv_total


def edge_loss(x: jnp.ndarray, y: jnp.ndarray, loss_weight: float = 1.0) -> jnp.ndarray:
    """Pallas implementation of EdgeLoss.forward(x, y) (reduction='mean')."""
    N, C, H, W = x.shape
    assert y.shape == x.shape
    nimg = N * C

    # Linearity: laplacian(x) - laplacian(y) == laplacian(x - y).
    d = (x.astype(jnp.float32) - y.astype(jnp.float32)).reshape(nimg, H, W)

    # Lane/sublane-dense packing: P images along the 128-lane axis, R
    # lane-groups stacked along sublanes.
    P_lane = max(1, 128 // W)
    R_row = min(max(1, 128 // H), -(-nimg // P_lane))
    BH, BW = R_row * H, P_lane * W
    ipb = R_row * P_lane                        # images per packed (BH,BW) tile
    n_blocks = -(-nimg // ipb)

    vmem_phys, n_cores = _tpu_hw_params()

    # Megacore split only where there are actually two TensorCores (v7x).
    P_split = 2 if (n_cores >= 2 and n_blocks >= 2) else 1

    # Sub-slabs per grid step: sized from physical VMEM (diff slab is the only
    # double-buffered growing term), capped at ~1024 block rows and at need.
    fixed_bytes = 4 * (2 * BH * BH + 2 * BW * BW + BH * BW)
    budget = (3 * vmem_phys) // 4
    per_sub = 2 * BH * BW * 4
    k_vmem = max(1, (budget - fixed_bytes) // per_sub)
    k_rows = max(1, 1024 // BH)
    k_need = -(-n_blocks // P_split)
    K = int(max(1, min(k_vmem, k_rows, k_need)))

    S = -(-n_blocks // (P_split * K))           # grid steps per partial
    tot_blocks = P_split * S * K
    tot_imgs = tot_blocks * ipb

    # Zero padding is exact: laplacian(0) == 0 contributes nothing to the sum.
    if tot_imgs > nimg:
        d = jnp.pad(d, ((0, tot_imgs - nimg), (0, 0), (0, 0)))

    # Rearrange into lane/sublane-dense (BH, BW) tiles stacked along rows; XLA
    # fuses the subtract / pad / transpose into one relayout pass.
    d2 = (d.reshape(tot_blocks, R_row, P_lane, H, W)
            .transpose(0, 1, 3, 2, 4)
            .reshape(tot_blocks * BH, BW))

    # Separable replicate-padded Gaussian with the even/even *4 mask folded in:
    #   conv(mask4 ⊙ conv(X)) = (A diag(2re) A) @ X @ (Bt diag(2ce) Bt)
    A = _conv_matrix(H, GAUSS_TAPS)             # (H, H),  out = A @ col
    Bt = _conv_matrix(W, GAUSS_TAPS).T          # (W, W),  out = row @ Bt
    re2 = 2.0 * (jnp.arange(H) % 2 == 0).astype(jnp.float32)
    ce2 = 2.0 * (jnp.arange(W) % 2 == 0).astype(jnp.float32)
    A2 = A @ (re2[:, None] * A)                 # A  @ diag(2re) @ A
    B2 = Bt @ (ce2[:, None] * Bt)               # Bt @ diag(2ce) @ Bt
    A2blk = jnp.kron(jnp.eye(R_row, dtype=jnp.float32), A2)    # (BH, BH)
    B2blk = jnp.kron(jnp.eye(P_lane, dtype=jnp.float32), B2)   # (BW, BW)

    inv_total = float(loss_weight) / float(N * C * H * W)

    # Real VMEM footprint (double-buffered diff slab + double-buffered
    # constants + acc scratch + outputs) plus 25% headroom.
    footprint = 4 * (2 * K * BH * BW + 2 * BH * BH + 2 * BW * BW
                     + BH * BW + 8 * P_split)
    vmem_limit = int(min(max(footprint + footprint // 4, 8 * 1024 * 1024),
                         vmem_phys - vmem_phys // 8))

    kernel = functools.partial(_edge_loss_kernel, inv_total, BH, K)

    partials = pl.pallas_call(
        kernel,
        out_shape=jax.ShapeDtypeStruct((P_split, 1, 1), jnp.float32),
        grid_spec=pltpu.PrefetchScalarGridSpec(
            num_scalar_prefetch=0,
            grid=(P_split, S),
            in_specs=[
                pl.BlockSpec((BH, BH), lambda p, s: (0, 0)),              # A2blk
                pl.BlockSpec((BW, BW), lambda p, s: (0, 0)),              # B2blk
                pl.BlockSpec((K * BH, BW), lambda p, s: (p * S + s, 0)),  # diff slab
            ],
            out_specs=pl.BlockSpec((1, 1, 1), lambda p, s: (p, 0, 0)),
            scratch_shapes=[pltpu.VMEM((BH, BW), jnp.float32)],
        ),
        compiler_params=pltpu.CompilerParams(
            dimension_semantics=("parallel", "arbitrary"),
            vmem_limit_bytes=vmem_limit),
    )(A2blk, B2blk, d2)

    return jnp.sum(partials)


# ----------------------------- pure-JAX reference -----------------------------
def _ref_edge_loss(x, y, loss_weight=1.0):
    N, C, H, W = x.shape

    def conv_gauss(img):  # img: (M, H, W), replicate pad + 5x5 separable gauss
        out = jnp.zeros_like(img)
        for p in range(5):
            ri = jnp.clip(jnp.arange(H) + p - 2, 0, H - 1)
            for q in range(5):
                ci = jnp.clip(jnp.arange(W) + q - 2, 0, W - 1)
                out = out + GAUSS_TAPS[p] * GAUSS_TAPS[q] * img[:, ri][:, :, ci]
        return out

    def laplacian(img):
        f1 = conv_gauss(img)
        nf = jnp.zeros_like(f1).at[:, ::2, ::2].set(f1[:, ::2, ::2] * 4.0)
        return img - conv_gauss(nf)

    xf = x.reshape(N * C, H, W).astype(jnp.float32)
    yf = y.reshape(N * C, H, W).astype(jnp.float32)
    d = laplacian(xf) - laplacian(yf)
    return jnp.mean(d * d) * loss_weight


if __name__ == "__main__":
    key = jax.random.PRNGKey(0)
    kx, ky = jax.random.split(key)
    # EdgeLoss's Gaussian kernel is built for 3 channels (depthwise, groups=3).
    N, C, H, W = 2, 3, 16, 16
    x = jax.random.normal(kx, (N, C, H, W), dtype=jnp.float32)
    y = jax.random.normal(ky, (N, C, H, W), dtype=jnp.float32)

    loss = jax.block_until_ready(edge_loss(x, y, loss_weight=1.0))
    ref = jax.block_until_ready(_ref_edge_loss(x, y, loss_weight=1.0))
    assert jnp.allclose(loss, ref, atol=1e-6, rtol=1e-4), (loss, ref)
    print("KERNEL_OK")
</pallas_src>

<mosaic_0001>
module attributes {stable_mosaic.version = 11 : i64} {
  func.func @_edge_loss_kernel(%arg0: i32, %arg1: i32, %arg2: memref<16x16xf32, #tpu.memory_space<vmem>>, %arg3: memref<128x128xf32, #tpu.memory_space<vmem>>, %arg4: memref<16x128xf32, #tpu.memory_space<vmem>>, %arg5: memref<1x1x1xf32, #tpu.memory_space<vmem>>, %arg6: memref<16x128xf32, #tpu.memory_space<vmem>>) attributes {dimension_semantics = [#tpu.dimension_semantics<parallel>, #tpu.dimension_semantics<arbitrary>], iteration_bounds = array<i64: 1, 1>, scalar_prefetch = 0 : i64, scratch_operands = 1 : i64, tpu.core_type = #tpu.core_type<tc>, window_params = [{pipeline_mode = #tpu.pipeline_mode<synchronous>, transform_indices = @transform_0, window_bounds = array<i64: 16, 16>}, {pipeline_mode = #tpu.pipeline_mode<synchronous>, transform_indices = @transform_1, window_bounds = array<i64: 128, 128>}, {transform_indices = @transform_2, window_bounds = array<i64: 16, 128>}, {transform_indices = @transform_3, window_bounds = array<i64: 1, 1, 1>}]} {
    %c0_i32 = arith.constant 0 : i32
    %0 = arith.cmpi eq, %arg1, %c0_i32 : i32
    %1 = arith.extui %0 : i1 to i32
    %c0_i32_0 = arith.constant 0 : i32
    %2 = arith.cmpi ne, %1, %c0_i32_0 : i32
    scf.if %2 {
      %cst_13 = arith.constant 0.000000e+00 : f32
      %19 = vector.broadcast %cst_13 : f32 to vector<16x128xf32>
      %c0_14 = arith.constant 0 : index
      %c0_15 = arith.constant 0 : index
      %20 = vector.load %arg6[%c0_14, %c0_15] : memref<16x128xf32, #tpu.memory_space<vmem>>, vector<16x128xf32>
      tpu.vector_store %arg6[%c0_14, %c0_15], %19 {strides = array<i32>} : memref<16x128xf32, #tpu.memory_space<vmem>>, vector<16x128xf32>,
    } else {
    }
    %c0 = arith.constant 0 : index
    %c0_1 = arith.constant 0 : index
    %3 = vector.load %arg2[%c0, %c0_1] : memref<16x16xf32, #tpu.memory_space<vmem>>, vector<16x16xf32>
    %c0_2 = arith.constant 0 : index
    %c0_3 = arith.constant 0 : index
    %4 = vector.load %arg3[%c0_2, %c0_3] : memref<128x128xf32, #tpu.memory_space<vmem>>, vector<128x128xf32>
    %c0_i32_4 = arith.constant 0 : i32
    %c16_i32 = arith.constant 16 : i32
    %5 = arith.muli %c0_i32_4, %c16_i32 : i32
    %6 = tpu.assume_multiple %5, 16 : i32
    %7 = arith.index_cast %6 : i32 to index
    %c0_5 = arith.constant 0 : index
    %8 = vector.load %arg4[%7, %c0_5] : memref<16x128xf32, #tpu.memory_space<vmem>>, vector<16x128xf32>
    %cst = arith.constant dense<0.000000e+00> : vector<16x128xf32>
    %9 = tpu.matmul %3, %8, %cst {dimension_numbers = #tpu.dot_dimension_numbers<[1], [0], [0], [1], [0, 0, 1, 1], [], []>} : vector<16x16xf32>, vector<16x128xf32>, vector<16x128xf32> -> vector<16x128xf32>
    %cst_6 = arith.constant dense<0.000000e+00> : vector<16x128xf32>
    %10 = tpu.matmul %9, %4, %cst_6 {dimension_numbers = #tpu.dot_dimension_numbers<[1], [0], [0], [1], [0, 0, 1, 1], [], []>} : vector<16x128xf32>, vector<128x128xf32>, vector<16x128xf32> -> vector<16x128xf32>
    %11 = arith.subf %8, %10 : vector<16x128xf32>
    %c0_7 = arith.constant 0 : index
    %c0_8 = arith.constant 0 : index
    %12 = vector.load %arg6[%c0_7, %c0_8] : memref<16x128xf32, #tpu.memory_space<vmem>>, vector<16x128xf32>
    %13 = arith.mulf %11, %11 : vector<16x128xf32>
    %14 = arith.addf %12, %13 : vector<16x128xf32>
    %c0_9 = arith.constant 0 : index
    %c0_10 = arith.constant 0 : index
    %15 = vector.load %arg6[%c0_9, %c0_10] : memref<16x128xf32, #tpu.memory_space<vmem>>, vector<16x128xf32>
    tpu.vector_store %arg6[%c0_9, %c0_10], %14 {strides = array<i32>} : memref<16x128xf32, #tpu.memory_space<vmem>>, vector<16x128xf32>,
    %c1_i32 = arith.constant 1 : i32
    %c0_i32_11 = arith.constant 0 : i32
    %16 = arith.cmpi eq, %arg1, %c0_i32_11 : i32
    %17 = arith.extui %16 : i1 to i32
    %c0_i32_12 = arith.constant 0 : i32
    %18 = arith.cmpi ne, %17, %c0_i32_12 : i32
    scf.if %18 {
      %cst_13 = arith.constant 0.000000e+00 : f32
      %19 = vector.broadcast %cst_13 : f32 to vector<1x1x1xf32>
      %c0_14 = arith.constant 0 : index
      %c0_15 = arith.constant 0 : index
      %20 = vector.load %arg6[%c0_14, %c0_15] : memref<16x128xf32, #tpu.memory_space<vmem>>, vector<16x128xf32>
      %21 = vector.shape_cast %20 : vector<16x128xf32> to vector<1x16x128xf32>
      %cst_16 = arith.constant dense<0.000000e+00> : vector<1xf32>
      %22 = vector.multi_reduction <add>, %21, %cst_16 [1, 2] : vector<1x16x128xf32> to vector<1xf32>
      %23 = vector.shape_cast %22 : vector<1xf32> to vector<1x1x1xf32>
      %24 = vector.extract %23[0, 0, 0] : f32 from vector<1x1x1xf32>
      %cst_17 = arith.constant 6.51041686E-4 : f32
      %25 = arith.mulf %24, %cst_17 : f32
      %26 = vector.broadcast %25 : f32 to vector<1x1x1xf32>
      %27 = arith.addf %19, %26 : vector<1x1x1xf32>
      %c0_18 = arith.constant 0 : index
      %c0_19 = arith.constant 0 : index
      %c0_20 = arith.constant 0 : index
      %28 = vector.load %arg5[%c0_18, %c0_19, %c0_20] : memref<1x1x1xf32, #tpu.memory_space<vmem>>, vector<1x1x1xf32>
      tpu.vector_store %arg5[%c0_18, %c0_19, %c0_20], %27 {strides = array<i32>} : memref<1x1x1xf32, #tpu.memory_space<vmem>>, vector<1x1x1xf32>,
    } else {
    }
    return
  }
  func.func @transform_0(%arg0: i32, %arg1: i32) -> (i32, i32) {
    %c0_i32 = arith.constant 0 : i32
    %c0_i32_0 = arith.constant 0 : i32
    %c0_i32_1 = arith.constant 0 : i32
    return %c0_i32, %c0_i32_0 : i32, i32
  }
  func.func @transform_1(%arg0: i32, %arg1: i32) -> (i32, i32) {
    %c0_i32 = arith.constant 0 : i32
    %c0_i32_0 = arith.constant 0 : i32
    %c0_i32_1 = arith.constant 0 : i32
    return %c0_i32, %c0_i32_0 : i32, i32
  }
  func.func @transform_2(%arg0: i32, %arg1: i32) -> (i32, i32) {
    %c1_i32 = arith.constant 1 : i32
    %0 = arith.muli %arg0, %c1_i32 : i32
    %1 = arith.addi %0, %arg1 : i32
    %c0_i32 = arith.constant 0 : i32
    %c0_i32_0 = arith.constant 0 : i32
    return %1, %c0_i32 : i32, i32
  }
  func.func @transform_3(%arg0: i32, %arg1: i32) -> (i32, i32, i32) {
    %c0_i32 = arith.constant 0 : i32
    %c0_i32_0 = arith.constant 0 : i32
    %c0_i32_1 = arith.constant 0 : i32
    return %arg0, %c0_i32, %c0_i32_0 : i32, i32, i32
  }
}

</mosaic_0001>

<llo_original>
// kernel: tpu_custom_call.1
$region0: #{tpu_custom_call.1}
  #allocation0 [shape = 'u32[]', space=smem, size = 0x4, offset = 0x4, fixed_abs, tag = 'smem constant byte address 0x4 - core index']
  #allocation1 [shape = 'u32[144,128]{1,0:T(1,128)}', space=vmem, size = 0x12000, scoped, tag = 'internal scratch']
  #allocation2 [shape = 'f32[16,128]{1,0:T(8,128)}', space=vmem, size = 0x2000, scoped, tag = 'scratch operand']
  %s0 = inlined_call_operand.hbm [shape: f32[16,16], index: 0, kind: input, shape index: {}]
  %s1 = inlined_call_operand.hbm [shape: f32[128,128], index: 1, kind: input, shape index: {}]
  %s2 = inlined_call_operand.hbm [shape: f32[16,128], index: 2, kind: input, shape index: {}]
  %s3 = inlined_call_operand.hbm [shape: f32[1,1,1], index: 3, kind: output, shape index: {}]
  %s4 = sld [smem:[#allocation0]]
  $region42: #{tpu_custom_call.1} parent=0
    _
  %s6 = ssub.s32 1, %s4
  %s7 = scalar_select 0, %s6, %s4
  $region1: #{tpu_custom_call.1} parent=0
    #allocation3 [shape = 'u8[8192]{0}', space=vmem, size = 0x2000, scoped, tag = 'input window, operand 0, single buffered']
    #allocation4 [shape = 's32[1]{0}', space=sflag, size = 0x4, scoped, tag = 'scoped memory for tpu_custom_call.1']
    #allocation5 [shape = 's32[1]{0}', space=sflag, size = 0x4, scoped, tag = 'scoped memory for tpu_custom_call.1']
    #allocation6 [shape = 'u8[65536]{0}', space=vmem, size = 0x10000, scoped, tag = 'input window, operand 1, single buffered']
    #allocation7 [shape = 's32[1]{0}', space=sflag, size = 0x4, scoped, tag = 'scoped memory for tpu_custom_call.1']
    #allocation8 [shape = 'u8[8192]{0}', space=vmem, size = 0x2000, scoped, tag = 'input window, operand 2, single buffered']
    #allocation9 [shape = 'u8[512]{0}', space=vmem, size = 0x400, scoped, tag = 'output window, operand 0, single buffered']
    %8 = vsyncpa [#allocation4], 0
    %9 = vsyncpa [#allocation7], 0
    %10 = vsyncpa [#allocation5], 0
    // Predicated region
    $region2: #{tpu_custom_call.1} parent=1 // pred_check
      _
    $region3: #{tpu_custom_call.1} parent=1 // pred_check_branch
      %12 = sbr.rel (0) target = $region5
    $region4: #{tpu_custom_call.1} parent=1 // pred_region
      %s14 = ssub.s32 256, 256
      %15 = vsyncadd [#allocation4], %s14
      %s16 = sshll.u32 [#allocation3], 4
      %s17 = int_to_ptr.vmem [resolvable:$true] %s16
      %22 = dma.hbm_to_vmem [thread:$0]  %s0, 256, %s17, [#allocation4], 128, 128, 8
    $region5: #{tpu_custom_call.1} parent=1 // pred_fallthru
      _
    // Predicated region
    $region6: #{tpu_custom_call.1} parent=1 // pred_check
      _
    $region7: #{tpu_custom_call.1} parent=1 // pred_check_branch
      %24 = sbr.rel (0) target = $region9
    $region8: #{tpu_custom_call.1} parent=1 // pred_region
      %s26 = ssub.s32 2048, 2048
      %27 = vsyncadd [#allocation7], %s26
      %s28 = sshll.u32 [#allocation6], 4
      %s29 = int_to_ptr.vmem [resolvable:$true] %s28
      %34 = dma.hbm_to_vmem [thread:$0]  %s1, 2048, %s29, [#allocation7], 128, 128, 8
    $region9: #{tpu_custom_call.1} parent=1 // pred_fallthru
      _
    // Predicated region
    $region10: #{tpu_custom_call.1} parent=1 // pred_check
      _
    $region11: #{tpu_custom_call.1} parent=1 // pred_check_branch
      %36 = sbr.rel (0) target = $region13
    $region12: #{tpu_custom_call.1} parent=1 // pred_region
      %s37 = sadd.s32 0, 0
      %s38 = smul.u32 2, %s37
      %s40 = ssub.s32 256, 256
      %41 = vsyncadd [#allocation7], %s40
      %s42 = smul.addr %s38, 128
      %s43 = scalar_lea.hbm %s2, %s42
      %s44 = sshll.u32 [#allocation8], 4
      %s45 = int_to_ptr.vmem [resolvable:$true] %s44
      %50 = dma.hbm_to_vmem [thread:$0]  %s43, 256, %s45, [#allocation7], 128, 128, 8
    $region13: #{tpu_custom_call.1} parent=1 // pred_fallthru
      _
    // Predicated region
    $region14: #{tpu_custom_call.1} parent=1 // pred_check
      _
    $region15: #{tpu_custom_call.1} parent=1 // pred_check_branch
      %52 = sbr.rel (0) target = $region17
    $region16: #{tpu_custom_call.1} parent=1 // pred_region
      %53 = dma.done [#allocation4], 256
    $region17: #{tpu_custom_call.1} parent=1 // pred_fallthru
      _
    // Predicated region
    $region18: #{tpu_custom_call.1} parent=1 // pred_check
      _
    $region19: #{tpu_custom_call.1} parent=1 // pred_check_branch
      %55 = sbr.rel (0) target = $region21
    $region20: #{tpu_custom_call.1} parent=1 // pred_region
      %56 = dma.done [#allocation7], 2048
    $region21: #{tpu_custom_call.1} parent=1 // pred_fallthru
      _
    // Predicated region
    $region22: #{tpu_custom_call.1} parent=1 // pred_check
      _
    $region23: #{tpu_custom_call.1} parent=1 // pred_check_branch
      %58 = sbr.rel (0) target = $region25
    $region24: #{tpu_custom_call.1} parent=1 // pred_region
      %59 = dma.done [#allocation7], 256
    $region25: #{tpu_custom_call.1} parent=1 // pred_fallthru
      _
    %s60 = sadd.s32 0, 0
    %s61 = smul.u32 2, %s60
    %p62 = scmp.eq.s32.totalorder 0, 0
    // Predicated region
    $region26: #{tpu_custom_call.1} parent=1 // pred_check
      %p63 = pneg %p62
    $region27: #{tpu_custom_call.1} parent=1 // pred_check_branch
      %65 = sbr.rel (%p63) target = $region29
    $region28: #{tpu_custom_call.1} parent=1 // pred_region
      %66 = vst [vmem:[#allocation2] sm:$0xff] 0.0
      %67 = vst [vmem:[#allocation2 + $0x8] sm:$0xff] 0.0
    $region29: #{tpu_custom_call.1} parent=1 // pred_fallthru
      _
    %v68 = vld [vmem:[#allocation3] sm:$0xff]
    %v69 = vld [vmem:[#allocation3 + $0x8] sm:$0xff]
    %v70 = vld [vmem:[#allocation6] sm:$0xff]
    %v71 = vld [vmem:[#allocation6 + $0x8] sm:$0xff]
    %v72 = vld [vmem:[#allocation6 + $0x10] sm:$0xff]
    %v73 = vld [vmem:[#allocation6 + $0x18] sm:$0xff]
    %v74 = vld [vmem:[#allocation6 + $0x20] sm:$0xff]
    %v75 = vld [vmem:[#allocation6 + $0x28] sm:$0xff]
    %v76 = vld [vmem:[#allocation6 + $0x30] sm:$0xff]
    %v77 = vld [vmem:[#allocation6 + $0x38] sm:$0xff]
    %v78 = vld [vmem:[#allocation6 + $0x40] sm:$0xff]
    %v79 = vld [vmem:[#allocation6 + $0x48] sm:$0xff]
    %v80 = vld [vmem:[#allocation6 + $0x50] sm:$0xff]
    %v81 = vld [vmem:[#allocation6 + $0x58] sm:$0xff]
    %v82 = vld [vmem:[#allocation6 + $0x60] sm:$0xff]
    %v83 = vld [vmem:[#allocation6 + $0x68] sm:$0xff]
    %v84 = vld [vmem:[#allocation6 + $0x70] sm:$0xff]
    %v85 = vld [vmem:[#allocation6 + $0x78] sm:$0xff]
    %v86 = vld [vmem:[#allocation8] sm:$0xff]
    %v87 = vld [vmem:[#allocation8 + $0x8] sm:$0xff]
    %vm88 = vcmask 130048
    %v90 = vsel %vm88, %v68, 0
    %v93 = vsel %vm88, %v69, 0
    %95 = vmatprep.subr.mxu0 0.0
    %96 = vmatpush1.msra.mxu0 %v86
    %97 = vmatprep.subr.mxu0 0.0
    %98 = vmatpush1.msra.mxu0 %v87
    %99 = vmatprep.subr.mxu0 0.0
    %100 = vmatpush1.msra.mxu0 0.0
    %101 = vmatprep.subr.mxu0 0.0
    %102 = vmatpush1.msra.mxu0 0.0
    %103 = vmatprep.subr.mxu0 0.0
    %104 = vmatpush1.msra.mxu0 0.0
    %105 = vmatprep.subr.mxu0 0.0
    %106 = vmatpush1.msra.mxu0 0.0
    %107 = vmatprep.subr.mxu0 0.0
    %108 = vmatpush1.msra.mxu0 0.0
    %109 = vmatprep.subr.mxu0 0.0
    %110 = vmatpush1.msra.mxu0 0.0
    %111 = vmatprep.subr.mxu0 0.0
    %112 = vmatpush1.msra.mxu0 0.0
    %113 = vmatprep.subr.mxu0 0.0
    %114 = vmatpush1.msra.mxu0 0.0
    %115 = vmatprep.subr.mxu0 0.0
    %116 = vmatpush1.msra.mxu0 0.0
    %117 = vmatprep.subr.mxu0 0.0
    %118 = vmatpush1.msra.mxu0 0.0
    %119 = vmatprep.subr.mxu0 0.0
    %120 = vmatpush1.msra.mxu0 0.0
    %121 = vmatprep.subr.mxu0 0.0
    %122 = vmatpush1.msra.mxu0 0.0
    %123 = vmatprep.subr.mxu0 0.0
    %124 = vmatpush1.msra.mxu0 0.0
    %125 = vmatprep.subr.mxu0 0.0
    %126 = vmatpush1.msra.mxu0 0.0
    %127 = vmatprep.subr.mxu0 0.0
    %128 = vmatpush1.msra.mxu0 0.0
    %129 = vmatprep.subr.mxu0 0.0
    %130 = vmatpush1.msra.mxu0 0.0
    %131 = vmatprep.subr.mxu0 0.0
    %132 = vmatpush1.msra.mxu0 0.0
    %133 = vmatprep.subr.mxu0 0.0
    %134 = vmatpush1.msra.mxu0 0.0
    %135 = vmatprep.subr.mxu0 0.0
    %136 = vmatpush1.msra.mxu0 0.0
    %137 = vmatprep.subr.mxu0 0.0
    %138 = vmatpush1.msra.mxu0 0.0
    %139 = vmatprep.subr.mxu0 0.0
    %140 = vmatpush1.msra.mxu0 0.0
    %141 = vmatprep.subr.mxu0 0.0
    %142 = vmatpush1.msra.mxu0 0.0
    %143 = vmatprep.subr.mxu0 0.0
    %144 = vmatpush1.msra.mxu0 0.0
    %145 = vmatprep.subr.mxu0 0.0
    %146 = vmatpush1.msra.mxu0 0.0
    %147 = vmatprep.subr.mxu0 0.0
    %148 = vmatpush1.msra.mxu0 0.0
    %149 = vmatprep.subr.mxu0 0.0
    %150 = vmatpush1.msra.mxu0 0.0
    %151 = vmatprep.subr.mxu0 0.0
    %152 = vmatpush1.msra.mxu0 0.0
    %153 = vmatprep.subr.mxu0 0.0
    %154 = vmatpush1.msra.mxu0 0.0
    %155 = vmatprep.subr.mxu0 0.0
    %156 = vmatpush1.msra.mxu0 0.0
    %157 = vmatprep.subr.mxu0 0.0
    %158 = vmatpush1.msra.mxu0 0.0
    %159 = vmatprep.mubr.f32.mxu0 0.0
    %160 = vmatmul.mubr.f32.gmra.mrb[0].mxu0 %v90
    %v161 = vpop.f32.mrb[0].mxu0
    %v162 = vadd.f32 0.0, %v161
    %v163 = vpop.f32.mrb[0].mxu0
    %164 = vmatprep.mubr.f32.mxu0 0.0
    %165 = vmatmul.mubr.f32.gmra.mrb[0].mxu0 %v93
    %v166 = vpop.f32.mrb[0].mxu0
    %v167 = vadd.f32 0.0, %v166
    %v168 = vpop.f32.mrb[0].mxu0
    %169 = vdwg.mxu0
    %170 = vmatprep.subr.mxu0 0.0
    %171 = vmatpush1.msra.mxu0 %v70
    %172 = vmatprep.subr.mxu0 0.0
    %173 = vmatpush1.msra.mxu0 %v71
    %174 = vmatprep.subr.mxu0 0.0
    %175 = vmatpush1.msra.mxu0 %v72
    %176 = vmatprep.subr.mxu0 0.0
    %177 = vmatpush1.msra.mxu0 %v73
    %178 = vmatprep.subr.mxu0 0.0
    %179 = vmatpush1.msra.mxu0 %v74
    %180 = vmatprep.subr.mxu0 0.0
    %181 = vmatpush1.msra.mxu0 %v75
    %182 = vmatprep.subr.mxu0 0.0
    %183 = vmatpush1.msra.mxu0 %v76
    %184 = vmatprep.subr.mxu0 0.0
    %185 = vmatpush1.msra.mxu0 %v77
    %186 = vmatprep.subr.mxu0 0.0
    %187 = vmatpush1.msra.mxu0 %v78
    %188 = vmatprep.subr.mxu0 0.0
    %189 = vmatpush1.msra.mxu0 %v79
    %190 = vmatprep.subr.mxu0 0.0
    %191 = vmatpush1.msra.mxu0 %v80
    %192 = vmatprep.subr.mxu0 0.0
    %193 = vmatpush1.msra.mxu0 %v81
    %194 = vmatprep.subr.mxu0 0.0
    %195 = vmatpush1.msra.mxu0 %v82
    %196 = vmatprep.subr.mxu0 0.0
    %197 = vmatpush1.msra.mxu0 %v83
    %198 = vmatprep.subr.mxu0 0.0
    %199 = vmatpush1.msra.mxu0 %v84
    %200 = vmatprep.subr.mxu0 0.0
    %201 = vmatpush1.msra.mxu0 %v85
    %202 = vmatprep.subr.mxu0 0.0
    %203 = vmatpush1.msra.mxu0 0.0
    %204 = vmatprep.subr.mxu0 0.0
    %205 = vmatpush1.msra.mxu0 0.0
    %206 = vmatprep.subr.mxu0 0.0
    %207 = vmatpush1.msra.mxu0 0.0
    %208 = vmatprep.subr.mxu0 0.0
    %209 = vmatpush1.msra.mxu0 0.0
    %210 = vmatprep.subr.mxu0 0.0
    %211 = vmatpush1.msra.mxu0 0.0
    %212 = vmatprep.subr.mxu0 0.0
    %213 = vmatpush1.msra.mxu0 0.0
    %214 = vmatprep.subr.mxu0 0.0
    %215 = vmatpush1.msra.mxu0 0.0
    %216 = vmatprep.subr.mxu0 0.0
    %217 = vmatpush1.msra.mxu0 0.0
    %218 = vmatprep.subr.mxu0 0.0
    %219 = vmatpush1.msra.mxu0 0.0
    %220 = vmatprep.subr.mxu0 0.0
    %221 = vmatpush1.msra.mxu0 0.0
    %222 = vmatprep.subr.mxu0 0.0
    %223 = vmatpush1.msra.mxu0 0.0
    %224 = vmatprep.subr.mxu0 0.0
    %225 = vmatpush1.msra.mxu0 0.0
    %226 = vmatprep.subr.mxu0 0.0
    %227 = vmatpush1.msra.mxu0 0.0
    %228 = vmatprep.subr.mxu0 0.0
    %229 = vmatpush1.msra.mxu0 0.0
    %230 = vmatprep.subr.mxu0 0.0
    %231 = vmatpush1.msra.mxu0 0.0
    %232 = vmatprep.subr.mxu0 0.0
    %233 = vmatpush1.msra.mxu0 0.0
    %234 = vmatprep.mubr.f32.mxu0 0.0
    %235 = vmatmul.mubr.f32.gmra.mrb[0].mxu0 %v162
    %v236 = vpop.f32.mrb[0].mxu0
    %v237 = vadd.f32 0.0, %v236
    %v238 = vpop.f32.mrb[0].mxu0
    %239 = vmatprep.mubr.f32.mxu0 0.0
    %240 = vmatmul.mubr.f32.gmra.mrb[0].mxu0 %v167
    %v241 = vpop.f32.mrb[0].mxu0
    %v242 = vadd.f32 0.0, %v241
    %v243 = vpop.f32.mrb[0].mxu0
    %244 = vdwg.mxu0
    %v245 = vsub.f32 %v86, %v237
    %v246 = vsub.f32 %v87, %v242
    %v247 = vld [vmem:[#allocation2] sm:$0xff]
    %v248 = vld [vmem:[#allocation2 + $0x8] sm:$0xff]
    %v249 = vmul.f32 %v245, %v245
    %v250 = vmul.f32 %v246, %v246
    %v251 = vadd.f32 %v247, %v249
    %v252 = vadd.f32 %v248, %v250
    %253 = vst [vmem:[#allocation2] sm:$0xff] %v251
    %254 = vst [vmem:[#allocation2 + $0x8] sm:$0xff] %v252
    // Predicated region
    $region30: #{tpu_custom_call.1} parent=1 // pred_check
      %p255 = pneg %p62
    $region31: #{tpu_custom_call.1} parent=1 // pred_check_branch
      %257 = sbr.rel (%p255) target = $region33
    $region32: #{tpu_custom_call.1} parent=1 // pred_region
      %v258 = vld [vmem:[#allocation2] sm:$0xff]
      %v259 = vld [vmem:[#allocation2 + $0x8] sm:$0xff]
      %v260 = vadd.f32 %v258, %v259
      %261 = vadd.xlane.f32.xlu0 %v260
      %v262 = vpop.xlane.xlu0 %261
      %v263 = vrot.slane %v262, 4
      %v264 = vadd.f32 %v262, %v263
      %v265 = vrot.slane %v264, 2
      %v266 = vadd.f32 %v264, %v265
      %v267 = vrot.slane %v266, 1
      %v268 = vadd.f32 %v266, %v267
      %s269 = vtos %v268
      %s270 = smul.f32 %s269, 0.0006510417
      %v271 = vstv %s270
      %v272 = vadd.f32 %v271, 0.0
      %vm273 = vcmask 0
      %274 = vst.msk [vmem:[#allocation9] sm:$0x1] %vm273, %v272
    $region33: #{tpu_custom_call.1} parent=1 // pred_fallthru
      _
    // Predicated region
    $region34: #{tpu_custom_call.1} parent=1 // pred_check
      _
    $region35: #{tpu_custom_call.1} parent=1 // pred_check_branch
      %276 = sbr.rel (0) target = $region37
    $region36: #{tpu_custom_call.1} parent=1 // pred_region
      %s278 = ssub.s32 16, 16
      %279 = vsyncadd [#allocation5], %s278
      %s281 = sshll.u32 [#allocation9], 4
      %s282 = int_to_ptr.vmem [resolvable:$true] %s281
      %284 = dma.vmem_to_hbm [thread:$0]  %s282, 16, %s3, [#allocation5]
    $region37: #{tpu_custom_call.1} parent=1 // pred_fallthru
      _
    // Predicated region
    $region38: #{tpu_custom_call.1} parent=1 // pred_check
      _
    $region39: #{tpu_custom_call.1} parent=1 // pred_check_branch
      %286 = sbr.rel (0) target = $region41
    $region40: #{tpu_custom_call.1} parent=1 // pred_region
      %287 = dma.done [#allocation5], 16
    $region41: #{tpu_custom_call.1} parent=1 // pred_fallthru
      _
    %288 = vsyncpa [#allocation4], 1
    %289 = vsyncpa [#allocation7], 1
    %290 = vsyncpa [#allocation5], 1

</llo_original>
